<compile_context>
chip_gen: v6e
topology: v6e:2x2x1
jax: 0.10.0
libtpu: 0.0.40
codegen_flags: <defaults>
</compile_context>

<pallas_src>
import math

import jax
import jax.numpy as jnp
from jax.experimental import pallas as pl
from jax.experimental.pallas import tpu as pltpu

HIDDEN = 32
HEADS = 8
HEAD_DIM = HIDDEN // HEADS
NEG_INF = -1e9


# --------------------------- fused MHA kernel ------------------------------ #
def _mha_fused_kernel(q_ref, k_ref, v_ref, w_ref, b_ref, bias_ref, sel_ref, o_ref):
    # q_ref/k_ref/v_ref: [1, S, H]   activations for one batch
    # w_ref:             [4, H, H]   stacked (wq, wk, wv, w_merge), stored [in, out]
    # b_ref:             [4, 1, H]   stacked (bq, bk, bv, b_merge)
    # bias_ref:          [1, 1, HEADS*S]  additive key-padding bias, tiled per head
    # sel_ref:           [HEADS*S, H]     head_sel[h*S + j, h'*D + d] = (h == h')
    # o_ref:             [1, S, H]
    S = o_ref.shape[1]
    H = o_ref.shape[2]
    D = H // HEADS
    scale = 1.0 / math.sqrt(D)

    # ---- Q/K/V projections: three back-to-back MXU passes, all in VMEM ----
    qp = jnp.dot(q_ref[0], w_ref[0], preferred_element_type=jnp.float32) + b_ref[0]
    kp = jnp.dot(k_ref[0], w_ref[1], preferred_element_type=jnp.float32) + b_ref[1]
    vp = jnp.dot(v_ref[0], w_ref[2], preferred_element_type=jnp.float32) + b_ref[2]
    qp = qp * scale  # fold 1/sqrt(d_k) into q ([S,H] mults instead of [S,heads*S])

    # ---- fold heads: block-diagonal K / V expansions ----
    head_sel = sel_ref[...]                                   # [HS, H], precomputed
    k_bd = jnp.tile(kp, (HEADS, 1)) * head_sel                # [HS, H]
    v_bd = jnp.tile(vp, (HEADS, 1)) * head_sel                # [HS, H]

    # scores[i, h*S + j] = <q_i, k_j> restricted to head h : one [S,H]x[H,HS] MXU op
    scores = jax.lax.dot_general(
        qp, k_bd, (((1,), (1,)), ((), ())),
        preferred_element_type=jnp.float32)                   # [S, HS]
    scores = scores + bias_ref[0]                             # -1e9 where masked

    # Per-head softmax over each group of S keys along the lane axis.
    # Subtracting the global row max is valid (softmax is shift-invariant per
    # query row) and keeps exp() <= 1.
    scores = scores - jnp.max(scores, axis=-1, keepdims=True)
    p = jnp.exp(scores)                                       # [S, HS]

    # TODO(synk): nn.Dropout(0.1) on the attention map is skipped (eval-mode identity).

    ctx = jnp.dot(p, v_bd, preferred_element_type=jnp.float32)        # [S,H] unnormalized
    denom = jnp.dot(p, head_sel, preferred_element_type=jnp.float32)  # [S,H] per-head sums
    ctx = ctx * pl.reciprocal(denom, approx=True)                     # EUP slot

    # ---- output projection ----
    out = jnp.dot(ctx, w_ref[3], preferred_element_type=jnp.float32) + b_ref[3]
    o_ref[0] = out.astype(o_ref.dtype)


# ------------------------------ wrapper ------------------------------------ #
def mhatt_forward(params, v, k, q, mask):
    """v, k, q: [B, S, HIDDEN] float32; mask: [B, 1, 1, S] bool (True = masked)."""
    B, S, H = q.shape
    HS = HEADS * S

    w_stack = jnp.stack([params["wq"], params["wk"], params["wv"], params["wm"]])
    b_stack = jnp.stack([params["bq"], params["bk"], params["bv"], params["bm"]])

    # Additive key-padding bias, tiled per head along the folded (head, key) axis.
    bias = jnp.where(mask, jnp.float32(NEG_INF), jnp.float32(0.0)).reshape(B, 1, S)
    bias = jnp.tile(bias, (1, 1, HEADS))                       # [B, 1, HEADS*S]

    # head_sel[h*S + j, h'*D + d] = 1.0 iff h == h'  (constant, computed once on host)
    row_head = jnp.arange(HS, dtype=jnp.int32)[:, None] // S
    col_head = jnp.arange(H, dtype=jnp.int32)[None, :] // HEAD_DIM
    head_sel = (row_head == col_head).astype(jnp.float32)      # [HS, H]

    return pl.pallas_call(
        _mha_fused_kernel,
        out_shape=jax.ShapeDtypeStruct((B, S, H), q.dtype),
        grid=(B,),
        in_specs=[
            pl.BlockSpec((1, S, H), lambda b: (b, 0, 0)),      # q
            pl.BlockSpec((1, S, H), lambda b: (b, 0, 0)),      # k
            pl.BlockSpec((1, S, H), lambda b: (b, 0, 0)),      # v
            pl.BlockSpec((4, H, H), lambda b: (0, 0, 0)),      # weights (resident)
            pl.BlockSpec((4, 1, H), lambda b: (0, 0, 0)),      # biases  (resident)
            pl.BlockSpec((1, 1, HS), lambda b: (b, 0, 0)),     # mask bias
            pl.BlockSpec((HS, H), lambda b: (0, 0)),           # head_sel (resident)
        ],
        out_specs=pl.BlockSpec((1, S, H), lambda b: (b, 0, 0)),
        compiler_params=pltpu.CompilerParams(
            dimension_semantics=("parallel",)),  # shard batches across v7x's 2 TCs
    )(q, k, v, w_stack, b_stack, bias, head_sel)


def init_params(key, hidden):
    bound = 1.0 / math.sqrt(hidden)
    keys = jax.random.split(key, 8)

    def w(kk):
        return jax.random.uniform(kk, (hidden, hidden), jnp.float32, -bound, bound)

    def b(kk):
        return jax.random.uniform(kk, (1, hidden), jnp.float32, -bound, bound)

    return {
        "wq": w(keys[0]), "bq": b(keys[1]),
        "wk": w(keys[2]), "bk": b(keys[3]),
        "wv": w(keys[4]), "bv": b(keys[5]),
        "wm": w(keys[6]), "bm": b(keys[7]),
    }


# ------------------------ pure-JAX reference (check) ----------------------- #
def mhatt_reference(params, v, k, q, mask):
    B, S, H = q.shape
    hp = jax.lax.Precision.HIGHEST

    def lin(x, w, b):
        return jnp.einsum("bsh,hk->bsk", x, w, precision=hp) + b

    def heads(x):
        return x.reshape(B, S, HEADS, HEAD_DIM).transpose(0, 2, 1, 3)

    qh = heads(lin(q, params["wq"], params["bq"]))
    kh = heads(lin(k, params["wk"], params["bk"]))
    vh = heads(lin(v, params["wv"], params["bv"]))
    scores = jnp.einsum("bhqd,bhkd->bhqk", qh, kh, precision=hp) / math.sqrt(HEAD_DIM)
    scores = jnp.where(mask, jnp.float32(NEG_INF), scores)
    p = jax.nn.softmax(scores, axis=-1)
    ctx = jnp.einsum("bhqk,bhkd->bhqd", p, vh, precision=hp)
    ctx = ctx.transpose(0, 2, 1, 3).reshape(B, S, H)
    return lin(ctx, params["wm"], params["bm"])


if __name__ == "__main__":
    B, S, H = 2, 8, HIDDEN

    key = jax.random.PRNGKey(0)
    k_params, k_v, k_k, k_q = jax.random.split(key, 4)

    params = init_params(k_params, H)
    v = jax.random.normal(k_v, (B, S, H), jnp.float32)
    k = jax.random.normal(k_k, (B, S, H), jnp.float32)
    q = jax.random.normal(k_q, (B, S, H), jnp.float32)
    # boolean padding mask [B, 1, 1, S]: mask out the last 2 keys of batch 1
    mask = jnp.zeros((B, 1, 1, S), dtype=jnp.bool_)
    mask = mask.at[1, 0, 0, -2:].set(True)

    fwd = jax.jit(mhatt_forward)
    out = fwd(params, v, k, q, mask)
    jax.block_until_ready(out)
    assert out.shape == (B, S, H)

    ref = mhatt_reference(params, v, k, q, mask)
    err = float(jnp.max(jnp.abs(out - ref)))
    assert err < 2e-2, f"max abs error vs reference: {err}"

    print("KERNEL_OK")
</pallas_src>

<mosaic_0001>
module attributes {stable_mosaic.version = 11 : i64} {
  func.func @_mha_fused_kernel(%arg0: i32, %arg1: memref<1x8x32xf32, #tpu.memory_space<vmem>>, %arg2: memref<1x8x32xf32, #tpu.memory_space<vmem>>, %arg3: memref<1x8x32xf32, #tpu.memory_space<vmem>>, %arg4: memref<4x32x32xf32, #tpu.memory_space<vmem>>, %arg5: memref<4x1x32xf32, #tpu.memory_space<vmem>>, %arg6: memref<1x1x64xf32, #tpu.memory_space<vmem>>, %arg7: memref<64x32xf32, #tpu.memory_space<vmem>>, %arg8: memref<1x8x32xf32, #tpu.memory_space<vmem>>) attributes {dimension_semantics = [#tpu.dimension_semantics<parallel>], iteration_bounds = array<i64: 2>, scalar_prefetch = 0 : i64, scratch_operands = 0 : i64, tpu.core_type = #tpu.core_type<tc>, window_params = [{transform_indices = @transform_0, window_bounds = array<i64: 1, 8, 32>}, {transform_indices = @transform_1, window_bounds = array<i64: 1, 8, 32>}, {transform_indices = @transform_2, window_bounds = array<i64: 1, 8, 32>}, {pipeline_mode = #tpu.pipeline_mode<synchronous>, transform_indices = @transform_3, window_bounds = array<i64: 4, 32, 32>}, {pipeline_mode = #tpu.pipeline_mode<synchronous>, transform_indices = @transform_4, window_bounds = array<i64: 4, 1, 32>}, {transform_indices = @transform_5, window_bounds = array<i64: 1, 1, 64>}, {pipeline_mode = #tpu.pipeline_mode<synchronous>, transform_indices = @transform_6, window_bounds = array<i64: 64, 32>}, {transform_indices = @transform_7, window_bounds = array<i64: 1, 8, 32>}]} {
    %c0 = arith.constant 0 : index
    %c0_0 = arith.constant 0 : index
    %c0_1 = arith.constant 0 : index
    %0 = vector.load %arg1[%c0, %c0_0, %c0_1] : memref<1x8x32xf32, #tpu.memory_space<vmem>>, vector<1x8x32xf32>
    %1 = vector.shape_cast %0 : vector<1x8x32xf32> to vector<8x32xf32>
    %c0_2 = arith.constant 0 : index
    %c0_3 = arith.constant 0 : index
    %c0_4 = arith.constant 0 : index
    %2 = vector.load %arg4[%c0_2, %c0_3, %c0_4] : memref<4x32x32xf32, #tpu.memory_space<vmem>>, vector<1x32x32xf32>
    %3 = vector.shape_cast %2 : vector<1x32x32xf32> to vector<32x32xf32>
    %cst = arith.constant dense<0.000000e+00> : vector<8x32xf32>
    %4 = tpu.matmul %1, %3, %cst {dimension_numbers = #tpu.dot_dimension_numbers<[1], [0], [0], [1], [0, 0, 1, 1], [], []>} : vector<8x32xf32>, vector<32x32xf32>, vector<8x32xf32> -> vector<8x32xf32>
    %c0_5 = arith.constant 0 : index
    %c0_6 = arith.constant 0 : index
    %c0_7 = arith.constant 0 : index
    %5 = vector.load %arg5[%c0_5, %c0_6, %c0_7] : memref<4x1x32xf32, #tpu.memory_space<vmem>>, vector<1x1x32xf32>
    %6 = vector.shape_cast %5 : vector<1x1x32xf32> to vector<1x32xf32>
    %7 = vector.broadcast %6 : vector<1x32xf32> to vector<8x32xf32>
    %8 = arith.addf %4, %7 : vector<8x32xf32>
    %c0_8 = arith.constant 0 : index
    %c0_9 = arith.constant 0 : index
    %c0_10 = arith.constant 0 : index
    %9 = vector.load %arg2[%c0_8, %c0_9, %c0_10] : memref<1x8x32xf32, #tpu.memory_space<vmem>>, vector<1x8x32xf32>
    %10 = vector.shape_cast %9 : vector<1x8x32xf32> to vector<8x32xf32>
    %c1 = arith.constant 1 : index
    %c0_11 = arith.constant 0 : index
    %c0_12 = arith.constant 0 : index
    %11 = vector.load %arg4[%c1, %c0_11, %c0_12] : memref<4x32x32xf32, #tpu.memory_space<vmem>>, vector<1x32x32xf32>
    %12 = vector.shape_cast %11 : vector<1x32x32xf32> to vector<32x32xf32>
    %cst_13 = arith.constant dense<0.000000e+00> : vector<8x32xf32>
    %13 = tpu.matmul %10, %12, %cst_13 {dimension_numbers = #tpu.dot_dimension_numbers<[1], [0], [0], [1], [0, 0, 1, 1], [], []>} : vector<8x32xf32>, vector<32x32xf32>, vector<8x32xf32> -> vector<8x32xf32>
    %c1_14 = arith.constant 1 : index
    %c0_15 = arith.constant 0 : index
    %c0_16 = arith.constant 0 : index
    %14 = vector.load %arg5[%c1_14, %c0_15, %c0_16] : memref<4x1x32xf32, #tpu.memory_space<vmem>>, vector<1x1x32xf32>
    %15 = vector.shape_cast %14 : vector<1x1x32xf32> to vector<1x32xf32>
    %16 = vector.broadcast %15 : vector<1x32xf32> to vector<8x32xf32>
    %17 = arith.addf %13, %16 : vector<8x32xf32>
    %c0_17 = arith.constant 0 : index
    %c0_18 = arith.constant 0 : index
    %c0_19 = arith.constant 0 : index
    %18 = vector.load %arg3[%c0_17, %c0_18, %c0_19] : memref<1x8x32xf32, #tpu.memory_space<vmem>>, vector<1x8x32xf32>
    %19 = vector.shape_cast %18 : vector<1x8x32xf32> to vector<8x32xf32>
    %c2 = arith.constant 2 : index
    %c0_20 = arith.constant 0 : index
    %c0_21 = arith.constant 0 : index
    %20 = vector.load %arg4[%c2, %c0_20, %c0_21] : memref<4x32x32xf32, #tpu.memory_space<vmem>>, vector<1x32x32xf32>
    %21 = vector.shape_cast %20 : vector<1x32x32xf32> to vector<32x32xf32>
    %cst_22 = arith.constant dense<0.000000e+00> : vector<8x32xf32>
    %22 = tpu.matmul %19, %21, %cst_22 {dimension_numbers = #tpu.dot_dimension_numbers<[1], [0], [0], [1], [0, 0, 1, 1], [], []>} : vector<8x32xf32>, vector<32x32xf32>, vector<8x32xf32> -> vector<8x32xf32>
    %c2_23 = arith.constant 2 : index
    %c0_24 = arith.constant 0 : index
    %c0_25 = arith.constant 0 : index
    %23 = vector.load %arg5[%c2_23, %c0_24, %c0_25] : memref<4x1x32xf32, #tpu.memory_space<vmem>>, vector<1x1x32xf32>
    %24 = vector.shape_cast %23 : vector<1x1x32xf32> to vector<1x32xf32>
    %25 = vector.broadcast %24 : vector<1x32xf32> to vector<8x32xf32>
    %26 = arith.addf %22, %25 : vector<8x32xf32>
    %cst_26 = arith.constant 5.000000e-01 : f32
    %27 = vector.broadcast %cst_26 : f32 to vector<8x32xf32>
    %28 = arith.mulf %8, %27 : vector<8x32xf32>
    %c0_27 = arith.constant 0 : index
    %c0_28 = arith.constant 0 : index
    %29 = vector.load %arg7[%c0_27, %c0_28] : memref<64x32xf32, #tpu.memory_space<vmem>>, vector<64x32xf32>
    %30 = tpu.concatenate %17, %17, %17, %17, %17, %17, %17, %17 in 0 : vector<8x32xf32>, vector<8x32xf32>, vector<8x32xf32>, vector<8x32xf32>, vector<8x32xf32>, vector<8x32xf32>, vector<8x32xf32>, vector<8x32xf32> -> vector<64x32xf32>
    %31 = arith.mulf %30, %29 : vector<64x32xf32>
    %32 = tpu.concatenate %26, %26, %26, %26, %26, %26, %26, %26 in 0 : vector<8x32xf32>, vector<8x32xf32>, vector<8x32xf32>, vector<8x32xf32>, vector<8x32xf32>, vector<8x32xf32>, vector<8x32xf32>, vector<8x32xf32> -> vector<64x32xf32>
    %33 = arith.mulf %32, %29 : vector<64x32xf32>
    %cst_29 = arith.constant dense<0.000000e+00> : vector<8x64xf32>
    %34 = tpu.matmul %28, %31, %cst_29 {dimension_numbers = #tpu.dot_dimension_numbers<[1], [1], [0], [0], [0, 0, 1, 0], [], []>} : vector<8x32xf32>, vector<64x32xf32>, vector<8x64xf32> -> vector<8x64xf32>
    %c0_30 = arith.constant 0 : index
    %c0_31 = arith.constant 0 : index
    %c0_32 = arith.constant 0 : index
    %35 = vector.load %arg6[%c0_30, %c0_31, %c0_32] : memref<1x1x64xf32, #tpu.memory_space<vmem>>, vector<1x1x64xf32>
    %36 = vector.shape_cast %35 : vector<1x1x64xf32> to vector<1x64xf32>
    %37 = vector.broadcast %36 : vector<1x64xf32> to vector<8x64xf32>
    %38 = arith.addf %34, %37 : vector<8x64xf32>
    %cst_33 = arith.constant dense<0xFF800000> : vector<8xf32>
    %39 = vector.multi_reduction <maximumf>, %38, %cst_33 [1] : vector<8x64xf32> to vector<8xf32>
    %40 = vector.shape_cast %39 : vector<8xf32> to vector<8x1xf32>
    %41 = vector.broadcast %40 : vector<8x1xf32> to vector<8x64xf32>
    %42 = arith.subf %38, %41 : vector<8x64xf32>
    %43 = math.exp %42 : vector<8x64xf32>
    %cst_34 = arith.constant dense<0.000000e+00> : vector<8x32xf32>
    %44 = tpu.matmul %43, %33, %cst_34 {dimension_numbers = #tpu.dot_dimension_numbers<[1], [0], [0], [1], [0, 0, 1, 1], [], []>} : vector<8x64xf32>, vector<64x32xf32>, vector<8x32xf32> -> vector<8x32xf32>
    %cst_35 = arith.constant dense<0.000000e+00> : vector<8x32xf32>
    %45 = tpu.matmul %43, %29, %cst_35 {dimension_numbers = #tpu.dot_dimension_numbers<[1], [0], [0], [1], [0, 0, 1, 1], [], []>} : vector<8x64xf32>, vector<64x32xf32>, vector<8x32xf32> -> vector<8x32xf32>
    %46 = tpu.reciprocal %45 {approx = true} : vector<8x32xf32> -> vector<8x32xf32>
    %47 = arith.mulf %44, %46 : vector<8x32xf32>
    %c3 = arith.constant 3 : index
    %c0_36 = arith.constant 0 : index
    %c0_37 = arith.constant 0 : index
    %48 = vector.load %arg4[%c3, %c0_36, %c0_37] : memref<4x32x32xf32, #tpu.memory_space<vmem>>, vector<1x32x32xf32>
    %49 = vector.shape_cast %48 : vector<1x32x32xf32> to vector<32x32xf32>
    %cst_38 = arith.constant dense<0.000000e+00> : vector<8x32xf32>
    %50 = tpu.matmul %47, %49, %cst_38 {dimension_numbers = #tpu.dot_dimension_numbers<[1], [0], [0], [1], [0, 0, 1, 1], [], []>} : vector<8x32xf32>, vector<32x32xf32>, vector<8x32xf32> -> vector<8x32xf32>
    %c3_39 = arith.constant 3 : index
    %c0_40 = arith.constant 0 : index
    %c0_41 = arith.constant 0 : index
    %51 = vector.load %arg5[%c3_39, %c0_40, %c0_41] : memref<4x1x32xf32, #tpu.memory_space<vmem>>, vector<1x1x32xf32>
    %52 = vector.shape_cast %51 : vector<1x1x32xf32> to vector<1x32xf32>
    %53 = vector.broadcast %52 : vector<1x32xf32> to vector<8x32xf32>
    %54 = arith.addf %50, %53 : vector<8x32xf32>
    %c0_42 = arith.constant 0 : index
    %c0_43 = arith.constant 0 : index
    %c0_44 = arith.constant 0 : index
    %55 = vector.load %arg8[%c0_42, %c0_43, %c0_44] : memref<1x8x32xf32, #tpu.memory_space<vmem>>, vector<1x8x32xf32>
    %56 = vector.shape_cast %55 : vector<1x8x32xf32> to vector<8x32xf32>
    %57 = vector.shape_cast %54 : vector<8x32xf32> to vector<1x8x32xf32>
    tpu.vector_store %arg8[%c0_42, %c0_43, %c0_44], %57 {strides = array<i32>} : memref<1x8x32xf32, #tpu.memory_space<vmem>>, vector<1x8x32xf32>,
    return
  }
  func.func @transform_0(%arg0: i32) -> (i32, i32, i32) {
    %c0_i32 = arith.constant 0 : i32
    %c0_i32_0 = arith.constant 0 : i32
    %c0_i32_1 = arith.constant 0 : i32
    return %arg0, %c0_i32, %c0_i32_0 : i32, i32, i32
  }
  func.func @transform_1(%arg0: i32) -> (i32, i32, i32) {
    %c0_i32 = arith.constant 0 : i32
    %c0_i32_0 = arith.constant 0 : i32
    %c0_i32_1 = arith.constant 0 : i32
    return %arg0, %c0_i32, %c0_i32_0 : i32, i32, i32
  }
  func.func @transform_2(%arg0: i32) -> (i32, i32, i32) {
    %c0_i32 = arith.constant 0 : i32
    %c0_i32_0 = arith.constant 0 : i32
    %c0_i32_1 = arith.constant 0 : i32
    return %arg0, %c0_i32, %c0_i32_0 : i32, i32, i32
  }
  func.func @transform_3(%arg0: i32) -> (i32, i32, i32) {
    %c0_i32 = arith.constant 0 : i32
    %c0_i32_0 = arith.constant 0 : i32
    %c0_i32_1 = arith.constant 0 : i32
    %c0_i32_2 = arith.constant 0 : i32
    return %c0_i32, %c0_i32_0, %c0_i32_1 : i32, i32, i32
  }
  func.func @transform_4(%arg0: i32) -> (i32, i32, i32) {
    %c0_i32 = arith.constant 0 : i32
    %c0_i32_0 = arith.constant 0 : i32
    %c0_i32_1 = arith.constant 0 : i32
    %c0_i32_2 = arith.constant 0 : i32
    return %c0_i32, %c0_i32_0, %c0_i32_1 : i32, i32, i32
  }
  func.func @transform_5(%arg0: i32) -> (i32, i32, i32) {
    %c0_i32 = arith.constant 0 : i32
    %c0_i32_0 = arith.constant 0 : i32
    %c0_i32_1 = arith.constant 0 : i32
    return %arg0, %c0_i32, %c0_i32_0 : i32, i32, i32
  }
  func.func @transform_6(%arg0: i32) -> (i32, i32) {
    %c0_i32 = arith.constant 0 : i32
    %c0_i32_0 = arith.constant 0 : i32
    %c0_i32_1 = arith.constant 0 : i32
    return %c0_i32, %c0_i32_0 : i32, i32
  }
  func.func @transform_7(%arg0: i32) -> (i32, i32, i32) {
    %c0_i32 = arith.constant 0 : i32
    %c0_i32_0 = arith.constant 0 : i32
    %c0_i32_1 = arith.constant 0 : i32
    return %arg0, %c0_i32, %c0_i32_0 : i32, i32, i32
  }
}

</mosaic_0001>

<llo_original>
// kernel: mhatt_forward.1
$region0: #{mhatt_forward.1}
  #allocation0 [shape = 'u32[]', space=smem, size = 0x4, offset = 0x4, fixed_abs, tag = 'smem constant byte address 0x4 - core index']
  #allocation1 [shape = 'u32[144,128]{1,0:T(1,128)}', space=vmem, size = 0x12000, scoped, tag = 'internal scratch']
  %s0 = inlined_call_operand.vmem [shape: f32[2,8,32], index: 0, kind: input, shape index: {}]
  %s1 = inlined_call_operand.vmem [shape: f32[2,8,32], index: 1, kind: input, shape index: {}]
  %s2 = inlined_call_operand.vmem [shape: f32[2,8,32], index: 2, kind: input, shape index: {}]
  %s3 = inlined_call_operand.vmem [shape: f32[4,32,32], index: 3, kind: input, shape index: {}]
  %s4 = inlined_call_operand.vmem [shape: f32[4,1,32], index: 4, kind: input, shape index: {}]
  %s5 = inlined_call_operand.vmem [shape: f32[2,1,64], index: 5, kind: input, shape index: {}]
  %s6 = inlined_call_operand.vmem [shape: f32[64,32], index: 6, kind: input, shape index: {}]
  %s7 = inlined_call_operand.hbm [shape: f32[2,8,32], index: 7, kind: output, shape index: {}]
  %s8 = sld [smem:[#allocation0]]
  $region61: #{mhatt_forward.1} parent=0
    _
  %s10 = ssub.s32 1, %s8
  %s11 = scalar_select 0, %s10, %s8
  $region1: #{mhatt_forward.1} parent=0
    #allocation2 [shape = 'u8[8192]{0}', space=vmem, size = 0x2000, scoped, tag = 'output window, operand 0']
    #allocation3 [shape = 's32[2]{0}', space=sflag, size = 0x8, scoped, tag = 'scoped memory for mhatt_forward.1']
    %12 = vsyncpa [#allocation3], 0
    %s13 = scalar_lea.sflag [#allocation3], 1
    %14 = vsyncpa %s13, 0
    loop: start=0, step=1, limit=4
    $region2: #{mhatt_forward.1} parent=1 // loop_pre_header
      _
    $region3: #{mhatt_forward.1} parent=1 // loop_header
      %s16 = sphi 0, %s20
      %p17 = scmp.ge.s32.totalorder %s16, 4
      %s26 = sphi 0, %s28
      %s29 = sphi 0, %s26
      %s30 = sphi 0, %s29
      %s46 = sphi 0, %s30
      %s52 = sphi 0, %s54
      %s55 = sphi 0, %s52
      %s56 = sphi 0, %s55
      %s72 = sphi 0, %s56
      %s78 = sphi 0, %s80
      %s81 = sphi 0, %s78
      %s82 = sphi 0, %s81
      %s98 = sphi 0, %s82
      %s102 = sphi 0, %s102
      %s104 = sphi 0, %s102
      %s105 = sphi 0, %s104
      %s119 = sphi 0, %s105
      %s123 = sphi 0, %s123
      %s125 = sphi 0, %s123
      %s126 = sphi 0, %s125
      %s140 = sphi 0, %s126
      %s146 = sphi 0, %s148
      %s149 = sphi 0, %s146
      %s150 = sphi 0, %s149
      %s166 = sphi 0, %s150
      %s170 = sphi 0, %s170
      %s172 = sphi 0, %s170
      %s173 = sphi 0, %s172
      %s187 = sphi 0, %s173
      %s193 = sphi 0, %s195
      %s196 = sphi 0, %s193
      %s197 = sphi 0, %s196
      %s213 = sphi 0, %s197
    $region4: #{mhatt_forward.1} parent=1 // loop_header_branch
      %19 = sbr.rel (%p17) target = $region8
    $region5: #{mhatt_forward.1} parent=1 // loop_body
      %s21 = ssub.s32 %s16, 1
      %s22 = ssub.s32 %s16, 2
      %s23 = sadd.s32 %s16, 1
      %s24 = ssub.s32 %s16, %s23
      %p25 = scmp.eq.s32.totalorder %s24, 0
      %s27 = sadd.s32 %s26, 1
      %s28 = scalar_select %p25, %s26, %s27
      %p31 = pneg %p25
      %p32 = scmp.eq.s32.totalorder %s16, 1
      %p33 = por %p31, %p32
      %p34 = scmp.ne.s32.totalorder %s26, %s29
      %p35 = scmp.eq.s32.totalorder %s16, 0
      %p36 = por %p34, %p35
      %p37 = scmp.ne.s32.totalorder %s26, %s29
      %p38 = scmp.eq.s32.totalorder %s21, 1
      %p39 = por %p37, %p38
      %p40 = scmp.ne.s32.totalorder %s29, %s30
      %p41 = scmp.eq.s32.totalorder %s21, 0
      %p42 = por %p40, %p41
      %p43 = scmp.ne.s32.totalorder %s29, %s30
      %p44 = scmp.eq.s32.totalorder %s22, 1
      %p45 = por %p43, %p44
      %p47 = scmp.ne.s32.totalorder %s30, %s46
      %p48 = scmp.eq.s32.totalorder %s22, 0
      %p49 = por %p47, %p48
      %s50 = ssub.s32 %s16, %s23
      %p51 = scmp.eq.s32.totalorder %s50, 0
      %s53 = sadd.s32 %s52, 1
      %s54 = scalar_select %p51, %s52, %s53
      %p57 = pneg %p51
      %p58 = scmp.eq.s32.totalorder %s16, 1
      %p59 = por %p57, %p58
      %p60 = scmp.ne.s32.totalorder %s52, %s55
      %p61 = scmp.eq.s32.totalorder %s16, 0
      %p62 = por %p60, %p61
      %p63 = scmp.ne.s32.totalorder %s52, %s55
      %p64 = scmp.eq.s32.totalorder %s21, 1
      %p65 = por %p63, %p64
      %p66 = scmp.ne.s32.totalorder %s55, %s56
      %p67 = scmp.eq.s32.totalorder %s21, 0
      %p68 = por %p66, %p67
      %p69 = scmp.ne.s32.totalorder %s55, %s56
      %p70 = scmp.eq.s32.totalorder %s22, 1
      %p71 = por %p69, %p70
      %p73 = scmp.ne.s32.totalorder %s56, %s72
      %p74 = scmp.eq.s32.totalorder %s22, 0
      %p75 = por %p73, %p74
      %s76 = ssub.s32 %s16, %s23
      %p77 = scmp.eq.s32.totalorder %s76, 0
      %s79 = sadd.s32 %s78, 1
      %s80 = scalar_select %p77, %s78, %s79
      %p83 = pneg %p77
      %p84 = scmp.eq.s32.totalorder %s16, 1
      %p85 = por %p83, %p84
      %p86 = scmp.ne.s32.totalorder %s78, %s81
      %p87 = scmp.eq.s32.totalorder %s16, 0
      %p88 = por %p86, %p87
      %p89 = scmp.ne.s32.totalorder %s78, %s81
      %p90 = scmp.eq.s32.totalorder %s21, 1
      %p91 = por %p89, %p90
      %p92 = scmp.ne.s32.totalorder %s81, %s82
      %p93 = scmp.eq.s32.totalorder %s21, 0
      %p94 = por %p92, %p93
      %p95 = scmp.ne.s32.totalorder %s81, %s82
      %p96 = scmp.eq.s32.totalorder %s22, 1
      %p97 = por %p95, %p96
      %p99 = scmp.ne.s32.totalorder %s82, %s98
      %p100 = scmp.eq.s32.totalorder %s22, 0
      %p101 = por %p99, %p100
      %s103 = sadd.s32 %s102, 1
      %p106 = scmp.eq.s32.totalorder %s16, 1
      %p107 = scmp.ne.s32.totalorder %s102, %s104
      %p108 = scmp.eq.s32.totalorder %s16, 0
      %p109 = por %p107, %p108
      %p110 = scmp.ne.s32.totalorder %s102, %s104
      %p111 = scmp.eq.s32.totalorder %s21, 1
      %p112 = por %p110, %p111
      %p113 = scmp.ne.s32.totalorder %s104, %s105
      %p114 = scmp.eq.s32.totalorder %s21, 0
      %p115 = por %p113, %p114
      %p116 = scmp.ne.s32.totalorder %s104, %s105
      %p117 = scmp.eq.s32.totalorder %s22, 1
      %p118 = por %p116, %p117
      %p120 = scmp.ne.s32.totalorder %s105, %s119
      %p121 = scmp.eq.s32.totalorder %s22, 0
      %p122 = por %p120, %p121
      %s124 = sadd.s32 %s123, 1
      %p127 = scmp.eq.s32.totalorder %s16, 1
      %p128 = scmp.ne.s32.totalorder %s123, %s125
      %p129 = scmp.eq.s32.totalorder %s16, 0
      %p130 = por %p128, %p129
      %p131 = scmp.ne.s32.totalorder %s123, %s125
      %p132 = scmp.eq.s32.totalorder %s21, 1
      %p133 = por %p131, %p132
      %p134 = scmp.ne.s32.totalorder %s125, %s126
      %p135 = scmp.eq.s32.totalorder %s21, 0
      %p136 = por %p134, %p135
      %p137 = scmp.ne.s32.totalorder %s125, %s126
      %p138 = scmp.eq.s32.totalorder %s22, 1
      %p139 = por %p137, %p138
      %p141 = scmp.ne.s32.totalorder %s126, %s140
      %p142 = scmp.eq.s32.totalorder %s22, 0
      %p143 = por %p141, %p142
      %s144 = ssub.s32 %s16, %s23
      %p145 = scmp.eq.s32.totalorder %s144, 0
      %s147 = sadd.s32 %s146, 1
      %s148 = scalar_select %p145, %s146, %s147
      %p151 = pneg %p145
      %p152 = scmp.eq.s32.totalorder %s16, 1
      %p153 = por %p151, %p152
      %p154 = scmp.ne.s32.totalorder %s146, %s149
      %p155 = scmp.eq.s32.totalorder %s16, 0
      %p156 = por %p154, %p155
      %p157 = scmp.ne.s32.totalorder %s146, %s149
      %p158 = scmp.eq.s32.totalorder %s21, 1
      %p159 = por %p157, %p158
      %p160 = scmp.ne.s32.totalorder %s149, %s150
      %p161 = scmp.eq.s32.totalorder %s21, 0
      %p162 = por %p160, %p161
      %p163 = scmp.ne.s32.totalorder %s149, %s150
      %p164 = scmp.eq.s32.totalorder %s22, 1
      %p165 = por %p163, %p164
      %p167 = scmp.ne.s32.totalorder %s150, %s166
      %p168 = scmp.eq.s32.totalorder %s22, 0
      %p169 = por %p167, %p168
      %s171 = sadd.s32 %s170, 1
      %p174 = scmp.eq.s32.totalorder %s16, 1
      %p175 = scmp.ne.s32.totalorder %s170, %s172
      %p176 = scmp.eq.s32.totalorder %s16, 0
      %p177 = por %p175, %p176
      %p178 = scmp.ne.s32.totalorder %s170, %s172
      %p179 = scmp.eq.s32.totalorder %s21, 1
      %p180 = por %p178, %p179
      %p181 = scmp.ne.s32.totalorder %s172, %s173
      %p182 = scmp.eq.s32.totalorder %s21, 0
      %p183 = por %p181, %p182
      %p184 = scmp.ne.s32.totalorder %s172, %s173
      %p185 = scmp.eq.s32.totalorder %s22, 1
      %p186 = por %p184, %p185
      %p188 = scmp.ne.s32.totalorder %s173, %s187
      %p189 = scmp.eq.s32.totalorder %s22, 0
      %p190 = por %p188, %p189
      %s191 = ssub.s32 %s16, %s23
      %p192 = scmp.eq.s32.totalorder %s191, 0
      %s194 = sadd.s32 %s193, 1
      %s195 = scalar_select %p192, %s193, %s194
      %p198 = pneg %p192
      %p199 = scmp.eq.s32.totalorder %s16, 1
      %p200 = por %p198, %p199
      %p201 = scmp.ne.s32.totalorder %s193, %s196
      %p202 = scmp.eq.s32.totalorder %s16, 0
      %p203 = por %p201, %p202
      %p204 = scmp.ne.s32.totalorder %s193, %s196
      %p205 = scmp.eq.s32.totalorder %s21, 1
      %p206 = por %p204, %p205
      %p207 = scmp.ne.s32.totalorder %s196, %s197
      %p208 = scmp.eq.s32.totalorder %s21, 0
      %p209 = por %p207, %p208
      %p210 = scmp.ne.s32.totalorder %s196, %s197
      %p211 = scmp.eq.s32.totalorder %s22, 1
      %p212 = por %p210, %p211
      %p214 = scmp.ne.s32.totalorder %s197, %s213
      %p215 = scmp.eq.s32.totalorder %s22, 0
      %p216 = por %p214, %p215
      %p217 = scmp.le.s32.totalorder 1, %s16
      %p218 = scmp.lt.s32.totalorder %s16, 3
      %p219 = pnand %p217, %p218
      %p220 = pneg %p219
      // Predicated region
      $region9: #{mhatt_forward.1} parent=5 // pred_check
        _
      $region10: #{mhatt_forward.1} parent=5 // pred_check_branch
        %222 = sbr.rel (%p219) target = $region12
      $region11: #{mhatt_forward.1} parent=5 // pred_region
        %s223 = ssub.s32 %s16, 1
        // Predicated region
        $region13: #{mhatt_forward.1} parent=11 // pred_check
          %p224 = pneg %p115
        $region14: #{mhatt_forward.1} parent=11 // pred_check_branch
          %226 = sbr.rel (%p224) target = $region16
        $region15: #{mhatt_forward.1} parent=11 // pred_region
          _
        $region16: #{mhatt_forward.1} parent=11 // pred_fallthru
          _
        // Predicated region
        $region17: #{mhatt_forward.1} parent=11 // pred_check
          %p227 = pneg %p136
        $region18: #{mhatt_forward.1} parent=11 // pred_check_branch
          %229 = sbr.rel (%p227) target = $region20
        $region19: #{mhatt_forward.1} parent=11 // pred_region
          _
        $region20: #{mhatt_forward.1} parent=11 // pred_fallthru
          _
        // Predicated region
        $region21: #{mhatt_forward.1} parent=11 // pred_check
          %p230 = pneg %p183
        $region22: #{mhatt_forward.1} parent=11 // pred_check_branch
          %232 = sbr.rel (%p230) target = $region24
        $region23: #{mhatt_forward.1} parent=11 // pred_region
          _
        $region24: #{mhatt_forward.1} parent=11 // pred_fallthru
          _
      $region12: #{mhatt_forward.1} parent=5 // pred_fallthru
        _
      %p233 = scmp.lt.s32.totalorder %s16, 2
      // Predicated region
      $region25: #{mhatt_forward.1} parent=5 // pred_check
        %p234 = pneg %p233
      $region26: #{mhatt_forward.1} parent=5 // pred_check_branch
        %236 = sbr.rel (%p234) target = $region28
      $region27: #{mhatt_forward.1} parent=5 // pred_region
        // Predicated region
        $region29: #{mhatt_forward.1} parent=27 // pred_check
          %p237 = pneg %p36
        $region30: #{mhatt_forward.1} parent=27 // pred_check_branch
          %239 = sbr.rel (%p237) target = $region32
        $region31: #{mhatt_forward.1} parent=27 // pred_region
          %p240 = scmp.lt.s32.totalorder %s16, 1
          %s241 = scalar_select %p240, %s16, 1
          %s242 = smul.addr %s241, 8
          %s243 = scalar_lea.vmem %s0, %s242
        $region32: #{mhatt_forward.1} parent=27 // pred_fallthru
          _
        // Predicated region
        $region33: #{mhatt_forward.1} parent=27 // pred_check
          %p244 = pneg %p62
        $region34: #{mhatt_forward.1} parent=27 // pred_check_branch
          %246 = sbr.rel (%p244) target = $region36
        $region35: #{mhatt_forward.1} parent=27 // pred_region
          %p247 = scmp.lt.s32.totalorder %s16, 1
          %s248 = scalar_select %p247, %s16, 1
          %s249 = smul.addr %s248, 8
          %s250 = scalar_lea.vmem %s1, %s249
        $region36: #{mhatt_forward.1} parent=27 // pred_fallthru
          _
        // Predicated region
        $region37: #{mhatt_forward.1} parent=27 // pred_check
          %p251 = pneg %p88
        $region38: #{mhatt_forward.1} parent=27 // pred_check_branch
          %253 = sbr.rel (%p251) target = $region40
        $region39: #{mhatt_forward.1} parent=27 // pred_region
          %p254 = scmp.lt.s32.totalorder %s16, 1
          %s255 = scalar_select %p254, %s16, 1
          %s256 = smul.addr %s255, 8
          %s257 = scalar_lea.vmem %s2, %s256
        $region40: #{mhatt_forward.1} parent=27 // pred_fallthru
          _
        // Predicated region
        $region41: #{mhatt_forward.1} parent=27 // pred_check
          %p258 = pneg %p156
        $region42: #{mhatt_forward.1} parent=27 // pred_check_branch
          %260 = sbr.rel (%p258) target = $region44
        $region43: #{mhatt_forward.1} parent=27 // pred_region
          %p261 = scmp.lt.s32.totalorder %s16, 1
          %s262 = scalar_select %p261, %s16, 1
          %s263 = scalar_lea.vmem %s5, %s262
        $region44: #{mhatt_forward.1} parent=27 // pred_fallthru
          _
      $region28: #{mhatt_forward.1} parent=5 // pred_fallthru
        _
      %p264 = scmp.le.s32.totalorder 1, %s16
      %p265 = scmp.lt.s32.totalorder %s16, 3
      %p266 = pnand %p264, %p265
      %p267 = pneg %p266
      // Predicated region
      $region45: #{mhatt_forward.1} parent=5 // pred_check
        _
      $region46: #{mhatt_forward.1} parent=5 // pred_check_branch
        %269 = sbr.rel (%p266) target = $region48
      $region47: #{mhatt_forward.1} parent=5 // pred_region
        %s270 = ssub.s32 %s16, 1
        %p271 = scmp.lt.s32.totalorder %s21, 1
        %s272 = scalar_select %p271, %s21, 1
        %s273 = smul.addr %s272, 8
        %s274 = scalar_lea.vmem %s0, %s273
        %p275 = pneg %p42
        %p276 = pneg %p39
        %p277 = scmp.lt.s32.totalorder %s21, 1
        %s278 = scalar_select %p277, %s21, 1
        %s279 = smul.addr %s278, 8
        %s280 = scalar_lea.vmem %s1, %s279
        %p281 = pneg %p68
        %p282 = pneg %p65
        %p283 = scmp.lt.s32.totalorder %s21, 1
        %s284 = scalar_select %p283, %s21, 1
        %s285 = smul.addr %s284, 8
        %s286 = scalar_lea.vmem %s2, %s285
        %p287 = pneg %p94
        %p288 = pneg %p91
        %p289 = pneg %p115
        %p290 = pneg %p112
        %p291 = pneg %p136
        %p292 = pneg %p133
        %p293 = scmp.lt.s32.totalorder %s21, 1
        %s294 = scalar_select %p293, %s21, 1
        %s295 = scalar_lea.vmem %s5, %s294
        %p296 = pneg %p162
        %p297 = pneg %p159
        %p298 = pneg %p183
        %p299 = pneg %p180
        %p300 = pneg %p209
        %p301 = pneg %p206
        %s302 = sand.u32 %s196, 1
        %s303 = scalar_lea.sflag [#allocation3], %s302
        %s304 = sand.u32 %s196, 1
        %s305 = smul.addr %s304, 8
        %s306 = scalar_lea.vmem [#allocation2], %s305
        %p307 = scmp.lt.s32.totalorder %s21, 1
        %s308 = scalar_select %p307, %s21, 1
        %s309 = smul.addr %s308, 8
        %s310 = scalar_lea.vmem %s0, %s309
        %p311 = scmp.lt.s32.totalorder %s21, 1
        %s312 = scalar_select %p311, %s21, 1
        %s313 = smul.addr %s312, 8
        %s314 = scalar_lea.vmem %s1, %s313
        %p315 = scmp.lt.s32.totalorder %s21, 1
        %s316 = scalar_select %p315, %s21, 1
        %s317 = smul.addr %s316, 8
        %s318 = scalar_lea.vmem %s2, %s317
        %p319 = scmp.lt.s32.totalorder %s21, 1
        %s320 = scalar_select %p319, %s21, 1
        %s321 = scalar_lea.vmem %s5, %s320
        %v322 = vld [vmem:[%s310] sm:$0xff]
        %v323 = vld [vmem:[%s3] sm:$0xff]
        %v324 = vld [vmem:[%s3 + $0x8] sm:$0xff]
        %v325 = vld [vmem:[%s3 + $0x10] sm:$0xff]
        %v326 = vld [vmem:[%s3 + $0x18] sm:$0xff]
        %v327 = vld [vmem:[%s4] sm:$0x1]
        %v329 = vlaneseq
        %v330 = vshrl.u32 %v329, 7
        %v331 = vsub.s32 0, %v330
        %v332 = vrot.slane %v327, %v331
        %vm334 = vcmask 261120
        %v336 = vsel %vm334, %v322, 0
        %338 = vmatprep.subr.mxu0 0.0
        %339 = vmatpush1.msra.mxu0 0.0
        %340 = vmatprep.subr.mxu0 0.0
        %341 = vmatpush1.msra.mxu0 0.0
        %342 = vmatprep.subr.mxu0 0.0
        %343 = vmatpush1.msra.mxu0 0.0
        %344 = vmatprep.subr.mxu0 0.0
        %345 = vmatpush1.msra.mxu0 0.0
        %346 = vmatprep.subr.mxu0 0.0
        %347 = vmatpush1.msra.mxu0 0.0
        %348 = vmatprep.subr.mxu0 0.0
        %349 = vmatpush1.msra.mxu0 0.0
        %350 = vmatprep.subr.mxu0 0.0
        %351 = vmatpush1.msra.mxu0 0.0
        %352 = vmatprep.subr.mxu0 0.0
        %353 = vmatpush1.msra.mxu0 0.0
        %354 = vmatprep.subr.mxu0 0.0
        %355 = vmatpush1.msra.mxu0 0.0
        %356 = vmatprep.subr.mxu0 0.0
        %357 = vmatpush1.msra.mxu0 0.0
        %358 = vmatprep.subr.mxu0 0.0
        %359 = vmatpush1.msra.mxu0 0.0
        %360 = vmatprep.subr.mxu0 0.0
        %361 = vmatpush1.msra.mxu0 0.0
        %362 = vmatprep.subr.mxu0 0.0
        %363 = vmatpush1.msra.mxu0 %v326
        %364 = vmatprep.subr.mxu0 0.0
        %365 = vmatpush1.msra.mxu0 %v325
        %366 = vmatprep.subr.mxu0 0.0
        %367 = vmatpush1.msra.mxu0 %v324
        %368 = vmatprep.subr.mxu0 0.0
        %369 = vmatpush1.msra.mxu0 %v323
        %370 = vmatprep.subr.mxu0 0.0
        %371 = vmatpush2.msra.mxu0 0.0
        %372 = vmatprep.subr.mxu0 0.0
        %373 = vmatpush2.msra.mxu0 0.0
        %374 = vmatprep.subr.mxu0 0.0
        %375 = vmatpush2.msra.mxu0 0.0
        %376 = vmatprep.subr.mxu0 0.0
        %377 = vmatpush2.msra.mxu0 0.0
        %378 = vmatprep.subr.mxu0 0.0
        %379 = vmatpush2.msra.mxu0 0.0
        %380 = vmatprep.subr.mxu0 0.0
        %381 = vmatpush2.msra.mxu0 0.0
        %382 = vmatprep.subr.mxu0 0.0
        %383 = vmatpush2.msra.mxu0 0.0
        %384 = vmatprep.subr.mxu0 0.0
        %385 = vmatpush2.msra.mxu0 0.0
        %386 = vmatprep.subr.mxu0 0.0
        %387 = vmatpush2.msra.mxu0 0.0
        %388 = vmatprep.subr.mxu0 0.0
        %389 = vmatpush2.msra.mxu0 0.0
        %390 = vmatprep.subr.mxu0 0.0
        %391 = vmatpush2.msra.mxu0 0.0
        %392 = vmatprep.subr.mxu0 0.0
        %393 = vmatpush2.msra.mxu0 0.0
        %394 = vmatprep.subr.mxu0 0.0
        %395 = vmatpush2.msra.mxu0 0.0
        %396 = vmatprep.subr.mxu0 0.0
        %397 = vmatpush2.msra.mxu0 0.0
        %398 = vmatprep.subr.mxu0 0.0
        %399 = vmatpush2.msra.mxu0 0.0
        %400 = vmatprep.subr.mxu0 0.0
        %401 = vmatpush2.msra.mxu0 0.0
        %402 = vmatprep.mubr.f32.mxu0 0.0
        %403 = vmatmul.mubr.f32.gmra.mxu0 %v336
        %v404 = vpop.f32.mrf.mxu0
        %v405 = vadd.f32 %v332, %v404
        %v406 = vpop.f32.mrf.mxu0
        %407 = vdwg.mxu0
        %v408 = vld [vmem:[%s314] sm:$0xff]
        %s409 = scalar_lea.vmem %s3, 32
        %v410 = vld [vmem:[%s409] sm:$0xff]
        %v411 = vld [vmem:[%s409 + $0x8] sm:$0xff]
        %v412 = vld [vmem:[%s409 + $0x10] sm:$0xff]
        %v413 = vld [vmem:[%s409 + $0x18] sm:$0xff]
        %s414 = scalar_lea.vmem %s4, 1
        %v415 = vld [vmem:[%s414] sm:$0x1]
        %v417 = vlaneseq
        %v418 = vshrl.u32 %v417, 7
        %v419 = vsub.s32 0, %v418
        %v420 = vrot.slane %v415, %v419
        %v423 = vsel %vm334, %v408, 0
        %425 = vmatprep.subr.mxu0 0.0
        %426 = vmatpush1.msra.mxu0 0.0
        %427 = vmatprep.subr.mxu0 0.0
        %428 = vmatpush1.msra.mxu0 0.0
        %429 = vmatprep.subr.mxu0 0.0
        %430 = vmatpush1.msra.mxu0 0.0
        %431 = vmatprep.subr.mxu0 0.0
        %432 = vmatpush1.msra.mxu0 0.0
        %433 = vmatprep.subr.mxu0 0.0
        %434 = vmatpush1.msra.mxu0 0.0
        %435 = vmatprep.subr.mxu0 0.0
        %436 = vmatpush1.msra.mxu0 0.0
        %437 = vmatprep.subr.mxu0 0.0
        %438 = vmatpush1.msra.mxu0 0.0
        %439 = vmatprep.subr.mxu0 0.0
        %440 = vmatpush1.msra.mxu0 0.0
        %441 = vmatprep.subr.mxu0 0.0
        %442 = vmatpush1.msra.mxu0 0.0
        %443 = vmatprep.subr.mxu0 0.0
        %444 = vmatpush1.msra.mxu0 0.0
        %445 = vmatprep.subr.mxu0 0.0
        %446 = vmatpush1.msra.mxu0 0.0
        %447 = vmatprep.subr.mxu0 0.0
        %448 = vmatpush1.msra.mxu0 0.0
        %449 = vmatprep.subr.mxu0 0.0
        %450 = vmatpush1.msra.mxu0 %v413
        %451 = vmatprep.subr.mxu0 0.0
        %452 = vmatpush1.msra.mxu0 %v412
        %453 = vmatprep.subr.mxu0 0.0
        %454 = vmatpush1.msra.mxu0 %v411
        %455 = vmatprep.subr.mxu0 0.0
        %456 = vmatpush1.msra.mxu0 %v410
        %457 = vmatprep.subr.mxu0 0.0
        %458 = vmatpush2.msra.mxu0 0.0
        %459 = vmatprep.subr.mxu0 0.0
        %460 = vmatpush2.msra.mxu0 0.0
        %461 = vmatprep.subr.mxu0 0.0
        %462 = vmatpush2.msra.mxu0 0.0
        %463 = vmatprep.subr.mxu0 0.0
        %464 = vmatpush2.msra.mxu0 0.0
        %465 = vmatprep.subr.mxu0 0.0
        %466 = vmatpush2.msra.mxu0 0.0
        %467 = vmatprep.subr.mxu0 0.0
        %468 = vmatpush2.msra.mxu0 0.0
        %469 = vmatprep.subr.mxu0 0.0
        %470 = vmatpush2.msra.mxu0 0.0
        %471 = vmatprep.subr.mxu0 0.0
        %472 = vmatpush2.msra.mxu0 0.0
        %473 = vmatprep.subr.mxu0 0.0
        %474 = vmatpush2.msra.mxu0 0.0
        %475 = vmatprep.subr.mxu0 0.0
        %476 = vmatpush2.msra.mxu0 0.0
        %477 = vmatprep.subr.mxu0 0.0
        %478 = vmatpush2.msra.mxu0 0.0
        %479 = vmatprep.subr.mxu0 0.0
        %480 = vmatpush2.msra.mxu0 0.0
        %481 = vmatprep.subr.mxu0 0.0
        %482 = vmatpush2.msra.mxu0 0.0
        %483 = vmatprep.subr.mxu0 0.0
        %484 = vmatpush2.msra.mxu0 0.0
        %485 = vmatprep.subr.mxu0 0.0
        %486 = vmatpush2.msra.mxu0 0.0
        %487 = vmatprep.subr.mxu0 0.0
        %488 = vmatpush2.msra.mxu0 0.0
        %489 = vmatprep.mubr.f32.mxu0 0.0
        %490 = vmatmul.mubr.f32.gmra.mxu0 %v423
        %v491 = vpop.f32.mrf.mxu0
        %v492 = vadd.f32 %v420, %v491
        %v493 = vpop.f32.mrf.mxu0
        %494 = vdwg.mxu0
        %v495 = vld [vmem:[%s318] sm:$0xff]
        %s496 = scalar_lea.vmem %s3, 64
        %v497 = vld [vmem:[%s496] sm:$0xff]
        %v498 = vld [vmem:[%s496 + $0x8] sm:$0xff]
        %v499 = vld [vmem:[%s496 + $0x10] sm:$0xff]
        %v500 = vld [vmem:[%s496 + $0x18] sm:$0xff]
        %s501 = scalar_lea.vmem %s4, 2
        %v502 = vld [vmem:[%s501] sm:$0x1]
        %v504 = vlaneseq
        %v505 = vshrl.u32 %v504, 7
        %v506 = vsub.s32 0, %v505
        %v507 = vrot.slane %v502, %v506
        %v510 = vsel %vm334, %v495, 0
        %512 = vmatprep.subr.mxu0 0.0
        %513 = vmatpush1.msra.mxu0 0.0
        %514 = vmatprep.subr.mxu0 0.0
        %515 = vmatpush1.msra.mxu0 0.0
        %516 = vmatprep.subr.mxu0 0.0
        %517 = vmatpush1.msra.mxu0 0.0
        %518 = vmatprep.subr.mxu0 0.0
        %519 = vmatpush1.msra.mxu0 0.0
        %520 = vmatprep.subr.mxu0 0.0
        %521 = vmatpush1.msra.mxu0 0.0
        %522 = vmatprep.subr.mxu0 0.0
        %523 = vmatpush1.msra.mxu0 0.0
        %524 = vmatprep.subr.mxu0 0.0
        %525 = vmatpush1.msra.mxu0 0.0
        %526 = vmatprep.subr.mxu0 0.0
        %527 = vmatpush1.msra.mxu0 0.0
        %528 = vmatprep.subr.mxu0 0.0
        %529 = vmatpush1.msra.mxu0 0.0
        %530 = vmatprep.subr.mxu0 0.0
        %531 = vmatpush1.msra.mxu0 0.0
        %532 = vmatprep.subr.mxu0 0.0
        %533 = vmatpush1.msra.mxu0 0.0
        %534 = vmatprep.subr.mxu0 0.0
        %535 = vmatpush1.msra.mxu0 0.0
        %536 = vmatprep.subr.mxu0 0.0
        %537 = vmatpush1.msra.mxu0 %v500
        %538 = vmatprep.subr.mxu0 0.0
        %539 = vmatpush1.msra.mxu0 %v499
        %540 = vmatprep.subr.mxu0 0.0
        %541 = vmatpush1.msra.mxu0 %v498
        %542 = vmatprep.subr.mxu0 0.0
        %543 = vmatpush1.msra.mxu0 %v497
        %544 = vmatprep.subr.mxu0 0.0
        %545 = vmatpush2.msra.mxu0 0.0
        %546 = vmatprep.subr.mxu0 0.0
        %547 = vmatpush2.msra.mxu0 0.0
        %548 = vmatprep.subr.mxu0 0.0
        %549 = vmatpush2.msra.mxu0 0.0
        %550 = vmatprep.subr.mxu0 0.0
        %551 = vmatpush2.msra.mxu0 0.0
        %552 = vmatprep.subr.mxu0 0.0
        %553 = vmatpush2.msra.mxu0 0.0
        %554 = vmatprep.subr.mxu0 0.0
        %555 = vmatpush2.msra.mxu0 0.0
        %556 = vmatprep.subr.mxu0 0.0
        %557 = vmatpush2.msra.mxu0 0.0
        %558 = vmatprep.subr.mxu0 0.0
        %559 = vmatpush2.msra.mxu0 0.0
        %560 = vmatprep.subr.mxu0 0.0
        %561 = vmatpush2.msra.mxu0 0.0
        %562 = vmatprep.subr.mxu0 0.0
        %563 = vmatpush2.msra.mxu0 0.0
        %564 = vmatprep.subr.mxu0 0.0
        %565 = vmatpush2.msra.mxu0 0.0
        %566 = vmatprep.subr.mxu0 0.0
        %567 = vmatpush2.msra.mxu0 0.0
        %568 = vmatprep.subr.mxu0 0.0
        %569 = vmatpush2.msra.mxu0 0.0
        %570 = vmatprep.subr.mxu0 0.0
        %571 = vmatpush2.msra.mxu0 0.0
        %572 = vmatprep.subr.mxu0 0.0
        %573 = vmatpush2.msra.mxu0 0.0
        %574 = vmatprep.subr.mxu0 0.0
        %575 = vmatpush2.msra.mxu0 0.0
        %576 = vmatprep.mubr.f32.mxu0 0.0
        %577 = vmatmul.mubr.f32.gmra.mxu0 %v510
        %v578 = vpop.f32.mrf.mxu0
        %v579 = vadd.f32 %v507, %v578
        %v580 = vpop.f32.mrf.mxu0
        %581 = vdwg.mxu0
        %v582 = vmul.f32 %v405, 0.5
        %v583 = vld [vmem:[%s6] sm:$0xff]
        %v584 = vld [vmem:[%s6 + $0x8] sm:$0xff]
        %v585 = vld [vmem:[%s6 + $0x10] sm:$0xff]
        %v586 = vld [vmem:[%s6 + $0x18] sm:$0xff]
        %v587 = vld [vmem:[%s6 + $0x20] sm:$0xff]
        %v588 = vld [vmem:[%s6 + $0x28] sm:$0xff]
        %v589 = vld [vmem:[%s6 + $0x30] sm:$0xff]
        %v590 = vld [vmem:[%s6 + $0x38] sm:$0xff]
        %v591 = vmul.f32 %v492, %v583
        %v592 = vmul.f32 %v492, %v584
        %v593 = vmul.f32 %v492, %v585
        %v594 = vmul.f32 %v492, %v586
        %v595 = vmul.f32 %v492, %v587
        %v596 = vmul.f32 %v492, %v588
        %v597 = vmul.f32 %v492, %v589
        %v598 = vmul.f32 %v492, %v590
        %v599 = vmul.f32 %v579, %v583
        %v600 = vmul.f32 %v579, %v584
        %v601 = vmul.f32 %v579, %v585
        %v602 = vmul.f32 %v579, %v586
        %v603 = vmul.f32 %v579, %v587
        %v604 = vmul.f32 %v579, %v588
        %v605 = vmul.f32 %v579, %v589
        %v606 = vmul.f32 %v579, %v590
        %v607 = vld [vmem:[%s321] sm:$0x1]
        %v609 = vlaneseq
        %v610 = vshrl.u32 %v609, 7
        %v611 = vsub.s32 0, %v610
        %v612 = vrot.slane %v607, %v611
        %v615 = vsel %vm334, %v582, 0
        %v618 = vsel %vm334, %v591, 0
        %v621 = vsel %vm334, %v592, 0
        %v624 = vsel %vm334, %v593, 0
        %v627 = vsel %vm334, %v594, 0
        %v630 = vsel %vm334, %v595, 0
        %v633 = vsel %vm334, %v596, 0
        %v636 = vsel %vm334, %v597, 0
        %v639 = vsel %vm334, %v598, 0
        %641 = vmatprep.subr.mxu0 0.0
        %642 = vmatpush1.xpose.msra.mxu0 0.0
        %643 = vmatprep.subr.mxu0 0.0
        %644 = vmatpush1.xpose.msra.mxu0 0.0
        %645 = vmatprep.subr.mxu0 0.0
        %646 = vmatpush1.xpose.msra.mxu0 0.0
        %647 = vmatprep.subr.mxu0 0.0
        %648 = vmatpush1.xpose.msra.mxu0 0.0
        %649 = vmatprep.subr.mxu0 0.0
        %650 = vmatpush1.xpose.msra.mxu0 0.0
        %651 = vmatprep.subr.mxu0 0.0
        %652 = vmatpush1.xpose.msra.mxu0 0.0
        %653 = vmatprep.subr.mxu0 0.0
        %654 = vmatpush1.xpose.msra.mxu0 0.0
        %655 = vmatprep.subr.mxu0 0.0
        %656 = vmatpush1.xpose.msra.mxu0 0.0
        %657 = vmatprep.subr.mxu0 0.0
        %658 = vmatpush1.xpose.msra.mxu0 %v639
        %659 = vmatprep.subr.mxu0 0.0
        %660 = vmatpush1.xpose.msra.mxu0 %v636
        %661 = vmatprep.subr.mxu0 0.0
        %662 = vmatpush1.xpose.msra.mxu0 %v633
        %663 = vmatprep.subr.mxu0 0.0
        %664 = vmatpush1.xpose.msra.mxu0 %v630
        %665 = vmatprep.subr.mxu0 0.0
        %666 = vmatpush1.xpose.msra.mxu0 %v627
        %667 = vmatprep.subr.mxu0 0.0
        %668 = vmatpush1.xpose.msra.mxu0 %v624
        %669 = vmatprep.subr.mxu0 0.0
        %670 = vmatpush1.xpose.msra.mxu0 %v621
        %671 = vmatprep.subr.mxu0 0.0
        %672 = vmatpush1.xpose.msra.mxu0 %v618
        %673 = vmatprep.subr.mxu0 0.0
        %674 = vmatpush2.xpose.msra.mxu0 0.0
        %675 = vmatprep.subr.mxu0 0.0
        %676 = vmatpush2.xpose.msra.mxu0 0.0
        %677 = vmatprep.subr.mxu0 0.0
        %678 = vmatpush2.xpose.msra.mxu0 0.0
        %679 = vmatprep.subr.mxu0 0.0
        %680 = vmatpush2.xpose.msra.mxu0 0.0
        %681 = vmatprep.subr.mxu0 0.0
        %682 = vmatpush2.xpose.msra.mxu0 0.0
        %683 = vmatprep.subr.mxu0 0.0
        %684 = vmatpush2.xpose.msra.mxu0 0.0
        %685 = vmatprep.subr.mxu0 0.0
        %686 = vmatpush2.xpose.msra.mxu0 0.0
        %687 = vmatprep.subr.mxu0 0.0
        %688 = vmatpush2.xpose.msra.mxu0 0.0
        %689 = vmatprep.subr.mxu0 0.0
        %690 = vmatpush2.xpose.msra.mxu0 0.0
        %691 = vmatprep.subr.mxu0 0.0
        %692 = vmatpush2.xpose.msra.mxu0 0.0
        %693 = vmatprep.subr.mxu0 0.0
        %694 = vmatpush2.xpose.msra.mxu0 0.0
        %695 = vmatprep.subr.mxu0 0.0
        %696 = vmatpush2.xpose.msra.mxu0 0.0
        %697 = vmatprep.subr.mxu0 0.0
        %698 = vmatpush2.xpose.msra.mxu0 0.0
        %699 = vmatprep.subr.mxu0 0.0
        %700 = vmatpush2.xpose.msra.mxu0 0.0
        %701 = vmatprep.subr.mxu0 0.0
        %702 = vmatpush2.xpose.msra.mxu0 0.0
        %703 = vmatprep.subr.mxu0 0.0
        %704 = vmatpush2.xpose.msra.mxu0 0.0
        %705 = vmatprep.mubr.f32.mxu0 0.0
        %706 = vmatmul.mubr.f32.gmra.mxu0 %v615
        %v707 = vpop.f32.mrf.mxu0
        %v708 = vadd.f32 %v612, %v707
        %v709 = vpop.f32.mrf.mxu0
        %710 = vdwg.mxu0
        %vm711 = vcmask 523264
        %v712 = vsel %vm711, %v708, -inf
        %713 = vmax.xlane.f32.xlu0 %v712
        %v714 = vpop.xlane.xlu0 %713
        %v715 = vsub.f32 %v708, %v714
        %v716 = vmul.f32 %v715, 1.442695
        %v717 = vpow.pop %v716
        %v719 = vsel %vm711, %v717, 0
        %721 = vmatprep.subr.mxu0 0.0
        %722 = vmatpush1.msra.mxu0 0.0
        %723 = vmatprep.subr.mxu0 0.0
        %724 = vmatpush1.msra.mxu0 0.0
        %725 = vmatprep.subr.mxu0 0.0
        %726 = vmatpush1.msra.mxu0 0.0
        %727 = vmatprep.subr.mxu0 0.0
        %728 = vmatpush1.msra.mxu0 0.0
        %729 = vmatprep.subr.mxu0 0.0
        %730 = vmatpush1.msra.mxu0 0.0
        %731 = vmatprep.subr.mxu0 0.0
        %732 = vmatpush1.msra.mxu0 0.0
        %733 = vmatprep.subr.mxu0 0.0
        %734 = vmatpush1.msra.mxu0 0.0
        %735 = vmatprep.subr.mxu0 0.0
        %736 = vmatpush1.msra.mxu0 0.0
        %737 = vmatprep.subr.mxu0 0.0
        %738 = vmatpush1.msra.mxu0 %v606
        %739 = vmatprep.subr.mxu0 0.0
        %740 = vmatpush1.msra.mxu0 %v605
        %741 = vmatprep.subr.mxu0 0.0
        %742 = vmatpush1.msra.mxu0 %v604
        %743 = vmatprep.subr.mxu0 0.0
        %744 = vmatpush1.msra.mxu0 %v603
        %745 = vmatprep.subr.mxu0 0.0
        %746 = vmatpush1.msra.mxu0 %v602
        %747 = vmatprep.subr.mxu0 0.0
        %748 = vmatpush1.msra.mxu0 %v601
        %749 = vmatprep.subr.mxu0 0.0
        %750 = vmatpush1.msra.mxu0 %v600
        %751 = vmatprep.subr.mxu0 0.0
        %752 = vmatpush1.msra.mxu0 %v599
        %753 = vmatprep.subr.mxu0 0.0
        %754 = vmatpush2.msra.mxu0 0.0
        %755 = vmatprep.subr.mxu0 0.0
        %756 = vmatpush2.msra.mxu0 0.0
        %757 = vmatprep.subr.mxu0 0.0
        %758 = vmatpush2.msra.mxu0 0.0
        %759 = vmatprep.subr.mxu0 0.0
        %760 = vmatpush2.msra.mxu0 0.0
        %761 = vmatprep.subr.mxu0 0.0
        %762 = vmatpush2.msra.mxu0 0.0
        %763 = vmatprep.subr.mxu0 0.0
        %764 = vmatpush2.msra.mxu0 0.0
        %765 = vmatprep.subr.mxu0 0.0
        %766 = vmatpush2.msra.mxu0 0.0
        %767 = vmatprep.subr.mxu0 0.0
        %768 = vmatpush2.msra.mxu0 0.0
        %769 = vmatprep.subr.mxu0 0.0
        %770 = vmatpush2.msra.mxu0 0.0
        %771 = vmatprep.subr.mxu0 0.0
        %772 = vmatpush2.msra.mxu0 0.0
        %773 = vmatprep.subr.mxu0 0.0
        %774 = vmatpush2.msra.mxu0 0.0
        %775 = vmatprep.subr.mxu0 0.0
        %776 = vmatpush2.msra.mxu0 0.0
        %777 = vmatprep.subr.mxu0 0.0
        %778 = vmatpush2.msra.mxu0 0.0
        %779 = vmatprep.subr.mxu0 0.0
        %780 = vmatpush2.msra.mxu0 0.0
        %781 = vmatprep.subr.mxu0 0.0
        %782 = vmatpush2.msra.mxu0 0.0
        %783 = vmatprep.subr.mxu0 0.0
        %784 = vmatpush2.msra.mxu0 0.0
        %785 = vmatprep.mubr.f32.mxu0 0.0
        %786 = vmatmul.mubr.f32.gmra.mxu0 %v719
        %v787 = vpop.f32.mrf.mxu0
        %v788 = vadd.f32 0.0, %v787
        %v789 = vpop.f32.mrf.mxu0
        %790 = vdwg.mxu0
        %791 = vmatprep.subr.mxu0 0.0
        %792 = vmatpush1.msra.mxu0 0.0
        %793 = vmatprep.subr.mxu0 0.0
        %794 = vmatpush1.msra.mxu0 0.0
        %795 = vmatprep.subr.mxu0 0.0
        %796 = vmatpush1.msra.mxu0 0.0
        %797 = vmatprep.subr.mxu0 0.0
        %798 = vmatpush1.msra.mxu0 0.0
        %799 = vmatprep.subr.mxu0 0.0
        %800 = vmatpush1.msra.mxu0 0.0
        %801 = vmatprep.subr.mxu0 0.0
        %802 = vmatpush1.msra.mxu0 0.0
        %803 = vmatprep.subr.mxu0 0.0
        %804 = vmatpush1.msra.mxu0 0.0
        %805 = vmatprep.subr.mxu0 0.0
        %806 = vmatpush1.msra.mxu0 0.0
        %807 = vmatprep.subr.mxu0 0.0
        %808 = vmatpush1.msra.mxu0 %v590
        %809 = vmatprep.subr.mxu0 0.0
        %810 = vmatpush1.msra.mxu0 %v589
        %811 = vmatprep.subr.mxu0 0.0
        %812 = vmatpush1.msra.mxu0 %v588
        %813 = vmatprep.subr.mxu0 0.0
        %814 = vmatpush1.msra.mxu0 %v587
        %815 = vmatprep.subr.mxu0 0.0
        %816 = vmatpush1.msra.mxu0 %v586
        %817 = vmatprep.subr.mxu0 0.0
        %818 = vmatpush1.msra.mxu0 %v585
        %819 = vmatprep.subr.mxu0 0.0
        %820 = vmatpush1.msra.mxu0 %v584
        %821 = vmatprep.subr.mxu0 0.0
        %822 = vmatpush1.msra.mxu0 %v583
        %823 = vmatprep.subr.mxu0 0.0
        %824 = vmatpush2.msra.mxu0 0.0
        %825 = vmatprep.subr.mxu0 0.0
        %826 = vmatpush2.msra.mxu0 0.0
        %827 = vmatprep.subr.mxu0 0.0
        %828 = vmatpush2.msra.mxu0 0.0
        %829 = vmatprep.subr.mxu0 0.0
        %830 = vmatpush2.msra.mxu0 0.0
        %831 = vmatprep.subr.mxu0 0.0
        %832 = vmatpush2.msra.mxu0 0.0
        %833 = vmatprep.subr.mxu0 0.0
        %834 = vmatpush2.msra.mxu0 0.0
        %835 = vmatprep.subr.mxu0 0.0
        %836 = vmatpush2.msra.mxu0 0.0
        %837 = vmatprep.subr.mxu0 0.0
        %838 = vmatpush2.msra.mxu0 0.0
        %839 = vmatprep.subr.mxu0 0.0
        %840 = vmatpush2.msra.mxu0 0.0
        %841 = vmatprep.subr.mxu0 0.0
        %842 = vmatpush2.msra.mxu0 0.0
        %843 = vmatprep.subr.mxu0 0.0
        %844 = vmatpush2.msra.mxu0 0.0
        %845 = vmatprep.subr.mxu0 0.0
        %846 = vmatpush2.msra.mxu0 0.0
        %847 = vmatprep.subr.mxu0 0.0
        %848 = vmatpush2.msra.mxu0 0.0
        %849 = vmatprep.subr.mxu0 0.0
        %850 = vmatpush2.msra.mxu0 0.0
        %851 = vmatprep.subr.mxu0 0.0
        %852 = vmatpush2.msra.mxu0 0.0
        %853 = vmatprep.subr.mxu0 0.0
        %854 = vmatpush2.msra.mxu0 0.0
        %855 = vmatprep.mubr.f32.mxu0 0.0
        %856 = vmatmul.mubr.f32.gmra.mxu0 %v719
        %v857 = vpop.f32.mrf.mxu0
        %v858 = vadd.f32 0.0, %v857
        %v859 = vpop.f32.mrf.mxu0
        %860 = vdwg.mxu0
        %v861 = vrcp.pop %v858
        %v862 = vmul.f32 %v788, %v861
        %s863 = scalar_lea.vmem %s3, 96
        %v864 = vld [vmem:[%s863] sm:$0xff]
        %v865 = vld [vmem:[%s863 + $0x8] sm:$0xff]
        %v866 = vld [vmem:[%s863 + $0x10] sm:$0xff]
        %v867 = vld [vmem:[%s863 + $0x18] sm:$0xff]
        %s868 = scalar_lea.vmem %s4, 3
        %v869 = vld [vmem:[%s868] sm:$0x1]
        %v871 = vlaneseq
        %v872 = vshrl.u32 %v871, 7
        %v873 = vsub.s32 0, %v872
        %v874 = vrot.slane %v869, %v873
        %v877 = vsel %vm334, %v862, 0
        %879 = vmatprep.subr.mxu0 0.0
        %880 = vmatpush1.msra.mxu0 0.0
        %881 = vmatprep.subr.mxu0 0.0
        %882 = vmatpush1.msra.mxu0 0.0
        %883 = vmatprep.subr.mxu0 0.0
        %884 = vmatpush1.msra.mxu0 0.0
        %885 = vmatprep.subr.mxu0 0.0
        %886 = vmatpush1.msra.mxu0 0.0
        %887 = vmatprep.subr.mxu0 0.0
        %888 = vmatpush1.msra.mxu0 0.0
        %889 = vmatprep.subr.mxu0 0.0
        %890 = vmatpush1.msra.mxu0 0.0
        %891 = vmatprep.subr.mxu0 0.0
        %892 = vmatpush1.msra.mxu0 0.0
        %893 = vmatprep.subr.mxu0 0.0
        %894 = vmatpush1.msra.mxu0 0.0
        %895 = vmatprep.subr.mxu0 0.0
        %896 = vmatpush1.msra.mxu0 0.0
        %897 = vmatprep.subr.mxu0 0.0
        %898 = vmatpush1.msra.mxu0 0.0
        %899 = vmatprep.subr.mxu0 0.0
        %900 = vmatpush1.msra.mxu0 0.0
        %901 = vmatprep.subr.mxu0 0.0
        %902 = vmatpush1.msra.mxu0 0.0
        %903 = vmatprep.subr.mxu0 0.0
        %904 = vmatpush1.msra.mxu0 %v867
        %905 = vmatprep.subr.mxu0 0.0
        %906 = vmatpush1.msra.mxu0 %v866
        %907 = vmatprep.subr.mxu0 0.0
        %908 = vmatpush1.msra.mxu0 %v865
        %909 = vmatprep.subr.mxu0 0.0
        %910 = vmatpush1.msra.mxu0 %v864
        %911 = vmatprep.subr.mxu0 0.0
        %912 = vmatpush2.msra.mxu0 0.0
        %913 = vmatprep.subr.mxu0 0.0
        %914 = vmatpush2.msra.mxu0 0.0
        %915 = vmatprep.subr.mxu0 0.0
        %916 = vmatpush2.msra.mxu0 0.0
        %917 = vmatprep.subr.mxu0 0.0
        %918 = vmatpush2.msra.mxu0 0.0
        %919 = vmatprep.subr.mxu0 0.0
        %920 = vmatpush2.msra.mxu0 0.0
        %921 = vmatprep.subr.mxu0 0.0
        %922 = vmatpush2.msra.mxu0 0.0
        %923 = vmatprep.subr.mxu0 0.0
        %924 = vmatpush2.msra.mxu0 0.0
        %925 = vmatprep.subr.mxu0 0.0
        %926 = vmatpush2.msra.mxu0 0.0
        %927 = vmatprep.subr.mxu0 0.0
        %928 = vmatpush2.msra.mxu0 0.0
        %929 = vmatprep.subr.mxu0 0.0
        %930 = vmatpush2.msra.mxu0 0.0
        %931 = vmatprep.subr.mxu0 0.0
        %932 = vmatpush2.msra.mxu0 0.0
        %933 = vmatprep.subr.mxu0 0.0
        %934 = vmatpush2.msra.mxu0 0.0
        %935 = vmatprep.subr.mxu0 0.0
        %936 = vmatpush2.msra.mxu0 0.0
        %937 = vmatprep.subr.mxu0 0.0
        %938 = vmatpush2.msra.mxu0 0.0
        %939 = vmatprep.subr.mxu0 0.0
        %940 = vmatpush2.msra.mxu0 0.0
        %941 = vmatprep.subr.mxu0 0.0
        %942 = vmatpush2.msra.mxu0 0.0
        %943 = vmatprep.mubr.f32.mxu0 0.0
        %944 = vmatmul.mubr.f32.gmra.mxu0 %v877
        %v945 = vpop.f32.mrf.mxu0
        %v946 = vadd.f32 %v874, %v945
        %v947 = vpop.f32.mrf.mxu0
        %948 = vdwg.mxu0
        %949 = vst.msk [vmem:[%s306] sm:$0xff] %vm334, %v946
        %s950 = sand.u32 %s196, 1
        %s951 = scalar_lea.sflag [#allocation3], %s950
        %s952 = sand.u32 %s196, 1
        %s953 = smul.addr %s952, 8
        %s954 = scalar_lea.vmem [#allocation2], %s953
        // Predicated region
        $region49: #{mhatt_forward.1} parent=47 // pred_check
          %p955 = pneg %p206
        $region50: #{mhatt_forward.1} parent=47 // pred_check_branch
          %957 = sbr.rel (%p955) target = $region52
        $region51: #{mhatt_forward.1} parent=47 // pred_region
          %s959 = ssub.s32 128, 128
          %960 = vsyncadd %s951, %s959
          %s961 = smul.addr %s21, 128
          %s962 = scalar_lea.hbm %s7, %s961
          %s964 = sshll.u32 %s954, 4
          %s965 = int_to_ptr.vmem [resolvable:$true] %s964
          %967 = dma.vmem_to_hbm [thread:$0]  %s965, 128, %s962, %s951
        $region52: #{mhatt_forward.1} parent=47 // pred_fallthru
          _
      $region48: #{mhatt_forward.1} parent=5 // pred_fallthru
        _
      %p968 = scmp.le.s32.totalorder 2, %s16
      // Predicated region
      $region53: #{mhatt_forward.1} parent=5 // pred_check
        %p969 = pneg %p968
      $region54: #{mhatt_forward.1} parent=5 // pred_check_branch
        %971 = sbr.rel (%p969) target = $region56
      $region55: #{mhatt_forward.1} parent=5 // pred_region
        %s972 = ssub.s32 %s16, 2
        // Predicated region
        $region57: #{mhatt_forward.1} parent=55 // pred_check
          %p973 = pneg %p212
        $region58: #{mhatt_forward.1} parent=55 // pred_check_branch
          %975 = sbr.rel (%p973) target = $region60
        $region59: #{mhatt_forward.1} parent=55 // pred_region
          %s976 = sand.u32 %s197, 1
          %s977 = scalar_lea.sflag [#allocation3], %s976
          %s978 = sand.u32 %s197, 1
          %s979 = smul.addr %s978, 8
          %s980 = scalar_lea.vmem [#allocation2], %s979
          %981 = dma.done %s977, 128
        $region60: #{mhatt_forward.1} parent=55 // pred_fallthru
          _
      $region56: #{mhatt_forward.1} parent=5 // pred_fallthru
        _
    $region6: #{mhatt_forward.1} parent=1 // loop_footer
      %s20 = sadd.s32 1, %s16
    $region7: #{mhatt_forward.1} parent=1 // loop_footer_branch
      %15 = sbr.rel target = $region3
    $region8: #{mhatt_forward.1} parent=1 // loop_exit
      _
    %982 = vsyncpa [#allocation3], 1
    %s983 = scalar_lea.sflag [#allocation3], 1
    %984 = vsyncpa %s983, 1

</llo_original>
